<compile_context>
chip_gen: v6e
topology: v6e:2x2x1
jax: 0.10.0
libtpu: 0.0.40
codegen_flags: <defaults>
</compile_context>

<pallas_src>
import jax
import jax.numpy as jnp
from jax.experimental import pallas as pl
from jax.experimental.pallas import tpu as pltpu


def _round_up(a, b):
    return pl.cdiv(a, b) * b


def _vmem_capacity_bytes() -> int:
    try:
        cap = int(pltpu.get_tpu_info().vmem_capacity_bytes)
        if cap > 0:
            return cap
    except Exception:
        pass
    return 64 * 1024 * 1024      # conservative fallback (v7x per-TC VMEM)


def _make_stce_kernel(tm: int, n_rows: int, needs_mask: bool):
    def kernel(x_ref, t_ref, o_ref):
        x = x_ref[...].astype(jnp.float32)          # (tm, C)
        t = t_ref[...].astype(jnp.float32)          # (tm, C)
        if needs_mask:
            # ragged last tile: rows >= n_rows contain unspecified data -> zero
            base = pl.program_id(0) * tm
            rows = base + jax.lax.broadcasted_iota(jnp.int32, (tm, 1), 0)
            valid = rows < n_rows
            x = jnp.where(valid, x, 0.0)
            t = jnp.where(valid, t, 0.0)
        # numerically stable log_softmax along the lane (class) axis
        m = jnp.max(x, axis=-1, keepdims=True)
        s = x - m
        lse = jnp.log(jnp.sum(jnp.exp(s), axis=-1, keepdims=True))
        # per-row loss: sum_c(-t * log_softmax(x)) == sum_c(t * (lse - s))
        o_ref[...] = jnp.sum(t * (lse - s), axis=-1, keepdims=True)
    return kernel


def soft_target_cross_entropy(x: jax.Array, target: jax.Array) -> jax.Array:
    """x: [..., C] logits, target: [..., C] soft labels. Scalar f32 mean loss."""
    assert x.shape == target.shape and x.ndim >= 2
    C = x.shape[-1]
    x2 = x.reshape(-1, C)
    t2 = target.reshape(-1, C)
    N = x2.shape[0]

    xb = jnp.dtype(x2.dtype).itemsize
    tb = jnp.dtype(t2.dtype).itemsize
    # sublane alignment: 8 rows for 4-byte dtypes, 16 if any input is 2-byte (bf16)
    row_align = 16 if min(xb, tb) < 4 else 8

    # ---- derive the row tile from the per-generation VMEM budget -------------
    vmem_cap = _vmem_capacity_bytes()
    budget = min(vmem_cap // 4, 48 * 1024 * 1024)
    # double-buffered x + target tiles, plus double-buffered f32 output column
    bytes_per_row = 2 * C * (xb + tb) + 2 * 4
    tm = budget // bytes_per_row
    tm = max(row_align, min(16384, tm))
    tm = min(tm, _round_up(N, row_align))        # never larger than the problem
    tm = max(row_align, (tm // row_align) * row_align)
    # TODO(synk): add class-dim tiling for extreme C where even row_align rows
    # exceed VMEM; typical classification heads fit comfortably.

    n_tiles = pl.cdiv(N, tm)
    needs_mask = (N % tm) != 0                   # ragged last tile -> in-kernel mask

    vmem_needed = tm * bytes_per_row + 4096
    vmem_limit = int(min(int(0.9 * vmem_cap),
                         max(2 * vmem_needed, 32 * 1024 * 1024)))

    row_losses = pl.pallas_call(
        _make_stce_kernel(tm, N, needs_mask),
        out_shape=jax.ShapeDtypeStruct((N, 1), jnp.float32),
        grid_spec=pltpu.PrefetchScalarGridSpec(
            num_scalar_prefetch=0,
            grid=(n_tiles,),
            in_specs=[
                pl.BlockSpec((tm, C), lambda i: (i, 0)),
                pl.BlockSpec((tm, C), lambda i: (i, 0)),
            ],
            out_specs=pl.BlockSpec((tm, 1), lambda i: (i, 0)),
        ),
        compiler_params=pltpu.CompilerParams(
            dimension_semantics=("parallel",),   # tiles independent -> both TCs
            vmem_limit_bytes=vmem_limit,
        ),
    )(x2, t2)

    # tiny final reduction; mean over the true number of rows
    return jnp.sum(row_losses) / jnp.float32(N)


def _reference(x, target):
    logp = jax.nn.log_softmax(x.astype(jnp.float32), axis=-1)
    return jnp.mean(jnp.sum(-target.astype(jnp.float32) * logp, axis=-1))


if __name__ == "__main__":
    key = jax.random.PRNGKey(0)
    kx, kt = jax.random.split(key)

    N, C = 16, 32  # (batch, num_classes) loss inputs
    x = jax.random.normal(kx, (N, C), dtype=jnp.float32)
    # soft targets: proper probability distributions per row
    target = jax.nn.softmax(jax.random.normal(kt, (N, C), dtype=jnp.float32), axis=-1)

    loss = jax.block_until_ready(soft_target_cross_entropy(x, target))
    ref = _reference(x, target)
    assert jnp.allclose(loss, ref, atol=1e-5, rtol=1e-5), (loss, ref)

    # bf16 inputs (halves HBM traffic for this bandwidth-bound loss; f32 math inside)
    x_bf = x.astype(jnp.bfloat16)
    t_bf = target.astype(jnp.bfloat16)
    loss_bf = jax.block_until_ready(soft_target_cross_entropy(x_bf, t_bf))
    ref_bf = _reference(x_bf, t_bf)
    assert jnp.allclose(loss_bf, ref_bf, atol=1e-4, rtol=1e-4), (loss_bf, ref_bf)

    # ragged row count: exercises the in-kernel last-tile mask (no jnp.pad copies)
    Nr = 13
    xr = jax.random.normal(kx, (Nr, C), dtype=jnp.float32)
    tr = jax.nn.softmax(jax.random.normal(kt, (Nr, C), dtype=jnp.float32), axis=-1)
    loss_r = jax.block_until_ready(soft_target_cross_entropy(xr, tr))
    ref_r = _reference(xr, tr)
    assert jnp.allclose(loss_r, ref_r, atol=1e-5, rtol=1e-5), (loss_r, ref_r)

    print("KERNEL_OK")
</pallas_src>

<mosaic_0001>
module attributes {stable_mosaic.version = 11 : i64} {
  func.func @kernel(%arg0: i32, %arg1: memref<16x32xf32, #tpu.memory_space<vmem>>, %arg2: memref<16x32xf32, #tpu.memory_space<vmem>>, %arg3: memref<16x1xf32, #tpu.memory_space<vmem>>) attributes {dimension_semantics = [#tpu.dimension_semantics<parallel>], iteration_bounds = array<i64: 1>, scalar_prefetch = 0 : i64, scratch_operands = 0 : i64, tpu.core_type = #tpu.core_type<tc>, window_params = [{transform_indices = @transform_0, window_bounds = array<i64: 16, 32>}, {transform_indices = @transform_1, window_bounds = array<i64: 16, 32>}, {transform_indices = @transform_2, window_bounds = array<i64: 16, 1>}]} {
    %c0 = arith.constant 0 : index
    %c0_0 = arith.constant 0 : index
    %0 = vector.load %arg1[%c0, %c0_0] : memref<16x32xf32, #tpu.memory_space<vmem>>, vector<16x32xf32>
    %c0_1 = arith.constant 0 : index
    %c0_2 = arith.constant 0 : index
    %1 = vector.load %arg2[%c0_1, %c0_2] : memref<16x32xf32, #tpu.memory_space<vmem>>, vector<16x32xf32>
    %cst = arith.constant dense<0xFF800000> : vector<16xf32>
    %2 = vector.multi_reduction <maximumf>, %0, %cst [1] : vector<16x32xf32> to vector<16xf32>
    %3 = vector.shape_cast %2 : vector<16xf32> to vector<16x1xf32>
    %4 = vector.broadcast %3 : vector<16x1xf32> to vector<16x32xf32>
    %5 = arith.subf %0, %4 : vector<16x32xf32>
    %6 = math.exp %5 : vector<16x32xf32>
    %cst_3 = arith.constant dense<0.000000e+00> : vector<16xf32>
    %7 = vector.multi_reduction <add>, %6, %cst_3 [1] : vector<16x32xf32> to vector<16xf32>
    %8 = vector.shape_cast %7 : vector<16xf32> to vector<16x1xf32>
    %9 = math.log %8 : vector<16x1xf32>
    %10 = vector.broadcast %9 : vector<16x1xf32> to vector<16x32xf32>
    %11 = arith.subf %10, %5 : vector<16x32xf32>
    %12 = arith.mulf %1, %11 : vector<16x32xf32>
    %cst_4 = arith.constant dense<0.000000e+00> : vector<16xf32>
    %13 = vector.multi_reduction <add>, %12, %cst_4 [1] : vector<16x32xf32> to vector<16xf32>
    %14 = vector.shape_cast %13 : vector<16xf32> to vector<16x1xf32>
    %c0_5 = arith.constant 0 : index
    %c0_6 = arith.constant 0 : index
    %15 = vector.load %arg3[%c0_5, %c0_6] : memref<16x1xf32, #tpu.memory_space<vmem>>, vector<16x1xf32>
    tpu.vector_store %arg3[%c0_5, %c0_6], %14 {strides = array<i32>} : memref<16x1xf32, #tpu.memory_space<vmem>>, vector<16x1xf32>,
    return
  }
  func.func @transform_0(%arg0: i32) -> (i32, i32) {
    %c0_i32 = arith.constant 0 : i32
    %c0_i32_0 = arith.constant 0 : i32
    return %arg0, %c0_i32 : i32, i32
  }
  func.func @transform_1(%arg0: i32) -> (i32, i32) {
    %c0_i32 = arith.constant 0 : i32
    %c0_i32_0 = arith.constant 0 : i32
    return %arg0, %c0_i32 : i32, i32
  }
  func.func @transform_2(%arg0: i32) -> (i32, i32) {
    %c0_i32 = arith.constant 0 : i32
    %c0_i32_0 = arith.constant 0 : i32
    return %arg0, %c0_i32 : i32, i32
  }
}

</mosaic_0001>

<llo_original>
// kernel: tpu_custom_call.1
$region0: #{tpu_custom_call.1}
  #allocation0 [shape = 'u32[]', space=smem, size = 0x4, offset = 0x4, fixed_abs, tag = 'smem constant byte address 0x4 - core index']
  #allocation1 [shape = 'u32[144,128]{1,0:T(1,128)}', space=vmem, size = 0x12000, scoped, tag = 'internal scratch']
  %s0 = inlined_call_operand.hbm [shape: f32[16,32], index: 0, kind: input, shape index: {}]
  %s1 = inlined_call_operand.hbm [shape: f32[16,32], index: 1, kind: input, shape index: {}]
  %s2 = inlined_call_operand.vmem [shape: f32[16,1], index: 2, kind: output, shape index: {}]
  %s3 = sld [smem:[#allocation0]]
  $region26: #{tpu_custom_call.1} parent=0
    _
  %s5 = ssub.s32 1, %s3
  %s6 = scalar_select 0, %s5, %s3
  $region1: #{tpu_custom_call.1} parent=0
    #allocation2 [shape = 'u8[8192]{0}', space=vmem, size = 0x2000, scoped, tag = 'input window, operand 0, single buffered']
    #allocation3 [shape = 's32[1]{0}', space=sflag, size = 0x4, scoped, tag = 'scoped memory for tpu_custom_call.1']
    #allocation4 [shape = 'u8[8192]{0}', space=vmem, size = 0x2000, scoped, tag = 'input window, operand 1, single buffered']
    #allocation5 [shape = 's32[1]{0}', space=sflag, size = 0x4, scoped, tag = 'scoped memory for tpu_custom_call.1']
    %7 = vsyncpa [#allocation3], 0
    %8 = vsyncpa [#allocation5], 0
    // Predicated region
    $region2: #{tpu_custom_call.1} parent=1 // pred_check
      _
    $region3: #{tpu_custom_call.1} parent=1 // pred_check_branch
      %10 = sbr.rel (0) target = $region5
    $region4: #{tpu_custom_call.1} parent=1 // pred_region
      %s12 = ssub.s32 256, 256
      %13 = vsyncadd [#allocation3], %s12
      %s14 = sshll.u32 [#allocation2], 4
      %s15 = int_to_ptr.vmem [resolvable:$true] %s14
      %20 = dma.hbm_to_vmem [thread:$0]  %s0, 256, %s15, [#allocation3], 128, 128, 8
    $region5: #{tpu_custom_call.1} parent=1 // pred_fallthru
      _
    // Predicated region
    $region6: #{tpu_custom_call.1} parent=1 // pred_check
      _
    $region7: #{tpu_custom_call.1} parent=1 // pred_check_branch
      %22 = sbr.rel (0) target = $region9
    $region8: #{tpu_custom_call.1} parent=1 // pred_region
      %s24 = ssub.s32 256, 256
      %25 = vsyncadd [#allocation5], %s24
      %s26 = sshll.u32 [#allocation4], 4
      %s27 = int_to_ptr.vmem [resolvable:$true] %s26
      %32 = dma.hbm_to_vmem [thread:$0]  %s1, 256, %s27, [#allocation5], 128, 128, 8
    $region9: #{tpu_custom_call.1} parent=1 // pred_fallthru
      _
    // Predicated region
    $region10: #{tpu_custom_call.1} parent=1 // pred_check
      _
    $region11: #{tpu_custom_call.1} parent=1 // pred_check_branch
      %34 = sbr.rel (0) target = $region13
    $region12: #{tpu_custom_call.1} parent=1 // pred_region
      %35 = dma.done [#allocation3], 256
    $region13: #{tpu_custom_call.1} parent=1 // pred_fallthru
      _
    // Predicated region
    $region14: #{tpu_custom_call.1} parent=1 // pred_check
      _
    $region15: #{tpu_custom_call.1} parent=1 // pred_check_branch
      %37 = sbr.rel (0) target = $region17
    $region16: #{tpu_custom_call.1} parent=1 // pred_region
      %38 = dma.done [#allocation5], 256
    $region17: #{tpu_custom_call.1} parent=1 // pred_fallthru
      _
    %v39 = vld [vmem:[#allocation2] sm:$0xff]
    %v40 = vld [vmem:[#allocation2 + $0x8] sm:$0xff]
    %v41 = vld [vmem:[#allocation4] sm:$0xff]
    %v42 = vld [vmem:[#allocation4 + $0x8] sm:$0xff]
    %vm43 = vcmask 261120
    %v44 = vsel %vm43, %v39, -inf
    %45 = vmax.xlane.f32.xlu0 %v44
    %v46 = vpop.xlane.xlu0 %45
    %v47 = vsel %vm43, %v40, -inf
    %48 = vmax.xlane.f32.xlu0 %v47
    %v49 = vpop.xlane.xlu0 %48
    %v50 = vsub.f32 %v39, %v46
    %v51 = vsub.f32 %v40, %v49
    %v52 = vmul.f32 %v50, 1.442695
    %v53 = vpow.pop %v52
    %v54 = vmul.f32 %v51, 1.442695
    %v55 = vpow.pop %v54
    %v56 = vsel %vm43, %v53, 0.0
    %57 = vadd.xlane.f32.xlu0 %v56
    %v58 = vpop.xlane.xlu0 %57
    %v59 = vsel %vm43, %v55, 0.0
    %60 = vadd.xlane.f32.xlu0 %v59
    %v61 = vpop.xlane.xlu0 %60
    %v62 = vlog2.pop %v58
    %v63 = vmul.f32 %v62, 0.6931472
    %v64 = vlog2.pop %v61
    %v65 = vmul.f32 %v64, 0.6931472
    %v66 = vsub.f32 %v63, %v50
    %v67 = vsub.f32 %v65, %v51
    %v68 = vmul.f32 %v41, %v66
    %v69 = vmul.f32 %v42, %v67
    %v70 = vsel %vm43, %v68, 0.0
    %71 = vadd.xlane.f32.xlu0 %v70
    %v72 = vpop.xlane.xlu0 %71
    %v73 = vsel %vm43, %v69, 0.0
    %74 = vadd.xlane.f32.xlu0 %v73
    %v75 = vpop.xlane.xlu0 %74
    %vm76 = vcmask 7168
    %77 = vst.msk [vmem:[%s2] sm:$0xff] %vm76, %v72
    %78 = vst.msk [vmem:[%s2 + $0x8] sm:$0xff] %vm76, %v75
    // Predicated region
    $region18: #{tpu_custom_call.1} parent=1 // pred_check
      _
    $region19: #{tpu_custom_call.1} parent=1 // pred_check_branch
      %80 = sbr.rel (0) target = $region21
    $region20: #{tpu_custom_call.1} parent=1 // pred_region
      _
    $region21: #{tpu_custom_call.1} parent=1 // pred_fallthru
      _
    // Predicated region
    $region22: #{tpu_custom_call.1} parent=1 // pred_check
      _
    $region23: #{tpu_custom_call.1} parent=1 // pred_check_branch
      %82 = sbr.rel (0) target = $region25
    $region24: #{tpu_custom_call.1} parent=1 // pred_region
      _
    $region25: #{tpu_custom_call.1} parent=1 // pred_fallthru
      _
    %83 = vsyncpa [#allocation3], 1
    %84 = vsyncpa [#allocation5], 1

</llo_original>
